<compile_context>
chip_gen: v6e
topology: v6e:2x2x1
jax: 0.10.0
libtpu: 0.0.40
codegen_flags: <defaults>
</compile_context>

<pallas_src>
import functools

import jax
import jax.numpy as jnp
from jax.experimental import pallas as pl
from jax.experimental.pallas import tpu as pltpu

IN_DIM = 500
HID_DIM = 600
HID_PAD = 640          # lane-aligned hidden width (multiple of 128)
NUM_CLASS = 2
OUT_PAD = 128          # lane-dense output width (>= NUM_CLASS, multiple of 128)
BN_EPS = 1e-5
MAX_TB = 256           # cap on batch-tile rows (VMEM-safe on v5e scoped default)


def _round_up(x, m):
    return ((x + m - 1) // m) * m


def _mlp_kernel(x_ref, w1_ref, shift_ref, w2_ref, o_ref):
    # fc (+ folded BN scale): (TB, 500) @ (500, 640) -> (TB, 640), f32 accumulate.
    h = jnp.dot(x_ref[...], w1_ref[...], preferred_element_type=jnp.float32)
    # folded BN shift + ReLU (dropout in eval mode is identity).
    h = jnp.maximum(h + shift_ref[...], 0.0)
    # out: (TB, 640) @ (640, 128) -> (TB, 128) lane-dense slab, f32 accumulate.
    o_ref[...] = jnp.dot(
        h.astype(w2_ref.dtype), w2_ref[...], preferred_element_type=jnp.float32
    ).astype(o_ref.dtype)


def prepare_params(w_fc, bn_gamma, bn_beta, bn_mean, bn_var, w_out,
                   *, compute_dtype=jnp.float32):
    """One-time weight preprocessing (keep OUT of the serving path).

    w_fc : (600, 500)  PyTorch Linear weight (out, in)
    bn_* : (600,)
    w_out: (num_class, 600)
    Returns (w1_scaled_padded, shift_padded, w2_padded).
    """
    inv_std = jax.lax.rsqrt(bn_var + BN_EPS)                    # (600,)
    scale = bn_gamma * inv_std                                  # (600,)
    shift = bn_beta - bn_mean * scale                           # (600,)
    # (in, out) layout; fold BN scale into w1 columns; pad hidden 600 -> 640.
    w1 = jnp.transpose(w_fc) * scale[None, :]                   # (500, 600)
    w1 = jnp.pad(w1, ((0, 0), (0, HID_PAD - HID_DIM)))          # (500, 640)
    shift = jnp.pad(shift, (0, HID_PAD - HID_DIM))              # (640,)
    w2 = jnp.transpose(w_out)                                   # (600, nc)
    w2 = jnp.pad(
        w2, ((0, HID_PAD - HID_DIM), (0, OUT_PAD - w2.shape[1]))
    )                                                           # (640, 128)
    return (
        w1.astype(compute_dtype),
        shift.reshape(1, HID_PAD).astype(jnp.float32),
        w2.astype(compute_dtype),
    )


@functools.partial(jax.jit, static_argnames=("tb",))
def simple_mlp_icentia(x, w1, shift, w2, *, tb=MAX_TB):
    """Fused forward pass.

    x     : (B, 500) float32
    w1    : (500, 640) scaled + padded first-layer weight (from prepare_params)
    shift : (1, 640) float32 folded BN shift (padded)
    w2    : (640, 128) zero-padded second-layer weight
    returns (B, NUM_CLASS) float32
    """
    B = x.shape[0]
    compute_dtype = w1.dtype

    # Balanced batch tiling: pick TB (multiple of 8, <= tb) that minimizes
    # padding given the number of tiles.
    num_tiles = -(-B // tb)
    TB = _round_up(-(-B // num_tiles), 8)
    B_pad = TB * num_tiles
    if B_pad != B:
        x = jnp.pad(x, ((0, B_pad - B), (0, 0)))
    x = x.astype(compute_dtype)

    grid = (num_tiles,)
    bytes_per = jnp.dtype(compute_dtype).itemsize
    cost = pl.CostEstimate(
        flops=2 * B_pad * (IN_DIM * HID_PAD + HID_PAD * OUT_PAD),
        transcendentals=0,
        bytes_accessed=(
            B_pad * IN_DIM * bytes_per            # x
            + IN_DIM * HID_PAD * bytes_per        # w1
            + HID_PAD * 4                         # shift
            + HID_PAD * OUT_PAD * bytes_per       # w2
            + B_pad * OUT_PAD * 4                 # out
        ),
    )

    out = pl.pallas_call(
        _mlp_kernel,
        out_shape=jax.ShapeDtypeStruct((B_pad, OUT_PAD), jnp.float32),
        grid_spec=pltpu.PrefetchScalarGridSpec(
            num_scalar_prefetch=0,
            grid=grid,
            in_specs=[
                pl.BlockSpec((TB, IN_DIM), lambda i: (i, 0)),        # x: batch-tiled
                pl.BlockSpec((IN_DIM, HID_PAD), lambda i: (0, 0)),   # w1: resident
                pl.BlockSpec((1, HID_PAD), lambda i: (0, 0)),        # shift: resident
                pl.BlockSpec((HID_PAD, OUT_PAD), lambda i: (0, 0)),  # w2: resident
            ],
            out_specs=pl.BlockSpec((TB, OUT_PAD), lambda i: (i, 0)),
        ),
        compiler_params=pltpu.CompilerParams(
            dimension_semantics=("parallel",),
        ),
        cost_estimate=cost,
    )(x, w1, shift, w2)

    return out[:B, :NUM_CLASS]


def _reference(x, w_fc, bn_gamma, bn_beta, bn_mean, bn_var, w_out):
    h = x @ w_fc.T
    h = (h - bn_mean) / jnp.sqrt(bn_var + BN_EPS) * bn_gamma + bn_beta
    h = jnp.maximum(h, 0.0)
    return h @ w_out.T


if __name__ == "__main__":
    key = jax.random.PRNGKey(0)
    k_x, k_w1, k_w2, k_g, k_b, k_m, k_v = jax.random.split(key, 7)

    B = 8  # small batch
    x = jax.random.normal(k_x, (B, IN_DIM), dtype=jnp.float32)

    # Deterministic parameter init (shapes follow nn.Linear / nn.BatchNorm1d).
    w_fc = jax.random.normal(k_w1, (HID_DIM, IN_DIM), dtype=jnp.float32) * 0.05
    w_out = jax.random.normal(k_w2, (NUM_CLASS, HID_DIM), dtype=jnp.float32) * 0.05
    bn_gamma = 1.0 + 0.1 * jax.random.normal(k_g, (HID_DIM,), dtype=jnp.float32)
    bn_beta = 0.1 * jax.random.normal(k_b, (HID_DIM,), dtype=jnp.float32)
    bn_mean = 0.1 * jax.random.normal(k_m, (HID_DIM,), dtype=jnp.float32)
    bn_var = jnp.abs(1.0 + 0.1 * jax.random.normal(k_v, (HID_DIM,), dtype=jnp.float32))

    ref = _reference(x, w_fc, bn_gamma, bn_beta, bn_mean, bn_var, w_out)

    # f32 path: exact-ish check.
    w1_f32, shift_f32, w2_f32 = prepare_params(
        w_fc, bn_gamma, bn_beta, bn_mean, bn_var, w_out, compute_dtype=jnp.float32
    )
    out = simple_mlp_icentia(x, w1_f32, shift_f32, w2_f32)
    out = jax.block_until_ready(out)
    assert out.shape == (B, NUM_CLASS)
    assert jnp.allclose(out, ref, atol=1e-4, rtol=1e-4), (
        f"f32 max abs err {jnp.max(jnp.abs(out - ref))}"
    )

    # bf16 path (MXU fast path on v6e/v7x): looser tolerance.
    w1_bf, shift_bf, w2_bf = prepare_params(
        w_fc, bn_gamma, bn_beta, bn_mean, bn_var, w_out, compute_dtype=jnp.bfloat16
    )
    out_bf = simple_mlp_icentia(x, w1_bf, shift_bf, w2_bf)
    out_bf = jax.block_until_ready(out_bf)
    assert jnp.allclose(out_bf, ref, atol=5e-2, rtol=5e-2), (
        f"bf16 max abs err {jnp.max(jnp.abs(out_bf - ref))}"
    )

    print("KERNEL_OK")
</pallas_src>

<mosaic_0001>
module attributes {stable_mosaic.version = 11 : i64} {
  func.func @_mlp_kernel(%arg0: i32, %arg1: memref<8x500xf32, #tpu.memory_space<vmem>>, %arg2: memref<500x640xf32, #tpu.memory_space<vmem>>, %arg3: memref<1x640xf32, #tpu.memory_space<vmem>>, %arg4: memref<640x128xf32, #tpu.memory_space<vmem>>, %arg5: memref<8x128xf32, #tpu.memory_space<vmem>>) attributes {dimension_semantics = [#tpu.dimension_semantics<parallel>], iteration_bounds = array<i64: 1>, scalar_prefetch = 0 : i64, scratch_operands = 0 : i64, tpu.core_type = #tpu.core_type<tc>, window_params = [{transform_indices = @transform_0, window_bounds = array<i64: 8, 500>}, {pipeline_mode = #tpu.pipeline_mode<synchronous>, transform_indices = @transform_1, window_bounds = array<i64: 500, 640>}, {pipeline_mode = #tpu.pipeline_mode<synchronous>, transform_indices = @transform_2, window_bounds = array<i64: 1, 640>}, {pipeline_mode = #tpu.pipeline_mode<synchronous>, transform_indices = @transform_3, window_bounds = array<i64: 640, 128>}, {transform_indices = @transform_4, window_bounds = array<i64: 8, 128>}]} {
    %c0 = arith.constant 0 : index
    %c0_0 = arith.constant 0 : index
    %0 = vector.load %arg1[%c0, %c0_0] : memref<8x500xf32, #tpu.memory_space<vmem>>, vector<8x500xf32>
    %c0_1 = arith.constant 0 : index
    %c0_2 = arith.constant 0 : index
    %1 = vector.load %arg2[%c0_1, %c0_2] : memref<500x640xf32, #tpu.memory_space<vmem>>, vector<500x640xf32>
    %cst = arith.constant dense<0.000000e+00> : vector<8x640xf32>
    %2 = tpu.matmul %0, %1, %cst {dimension_numbers = #tpu.dot_dimension_numbers<[1], [0], [0], [1], [0, 0, 1, 1], [], []>} : vector<8x500xf32>, vector<500x640xf32>, vector<8x640xf32> -> vector<8x640xf32>
    %c0_3 = arith.constant 0 : index
    %c0_4 = arith.constant 0 : index
    %3 = vector.load %arg3[%c0_3, %c0_4] : memref<1x640xf32, #tpu.memory_space<vmem>>, vector<1x640xf32>
    %4 = vector.broadcast %3 : vector<1x640xf32> to vector<8x640xf32>
    %5 = arith.addf %2, %4 : vector<8x640xf32>
    %cst_5 = arith.constant 0.000000e+00 : f32
    %6 = vector.broadcast %cst_5 : f32 to vector<8x640xf32>
    %7 = arith.maximumf %5, %6 : vector<8x640xf32>
    %c0_6 = arith.constant 0 : index
    %c0_7 = arith.constant 0 : index
    %8 = vector.load %arg4[%c0_6, %c0_7] : memref<640x128xf32, #tpu.memory_space<vmem>>, vector<640x128xf32>
    %cst_8 = arith.constant dense<0.000000e+00> : vector<8x128xf32>
    %9 = tpu.matmul %7, %8, %cst_8 {dimension_numbers = #tpu.dot_dimension_numbers<[1], [0], [0], [1], [0, 0, 1, 1], [], []>} : vector<8x640xf32>, vector<640x128xf32>, vector<8x128xf32> -> vector<8x128xf32>
    %c0_9 = arith.constant 0 : index
    %c0_10 = arith.constant 0 : index
    %10 = vector.load %arg5[%c0_9, %c0_10] : memref<8x128xf32, #tpu.memory_space<vmem>>, vector<8x128xf32>
    tpu.vector_store %arg5[%c0_9, %c0_10], %9 {strides = array<i32>} : memref<8x128xf32, #tpu.memory_space<vmem>>, vector<8x128xf32>,
    return
  }
  func.func @transform_0(%arg0: i32) -> (i32, i32) {
    %c0_i32 = arith.constant 0 : i32
    %c0_i32_0 = arith.constant 0 : i32
    return %arg0, %c0_i32 : i32, i32
  }
  func.func @transform_1(%arg0: i32) -> (i32, i32) {
    %c0_i32 = arith.constant 0 : i32
    %c0_i32_0 = arith.constant 0 : i32
    %c0_i32_1 = arith.constant 0 : i32
    return %c0_i32, %c0_i32_0 : i32, i32
  }
  func.func @transform_2(%arg0: i32) -> (i32, i32) {
    %c0_i32 = arith.constant 0 : i32
    %c0_i32_0 = arith.constant 0 : i32
    %c0_i32_1 = arith.constant 0 : i32
    return %c0_i32, %c0_i32_0 : i32, i32
  }
  func.func @transform_3(%arg0: i32) -> (i32, i32) {
    %c0_i32 = arith.constant 0 : i32
    %c0_i32_0 = arith.constant 0 : i32
    %c0_i32_1 = arith.constant 0 : i32
    return %c0_i32, %c0_i32_0 : i32, i32
  }
  func.func @transform_4(%arg0: i32) -> (i32, i32) {
    %c0_i32 = arith.constant 0 : i32
    %c0_i32_0 = arith.constant 0 : i32
    return %arg0, %c0_i32 : i32, i32
  }
}

</mosaic_0001>

<llo_original>
// kernel: simple_mlp_icentia.1
$region0: #{simple_mlp_icentia.1}
  #allocation0 [shape = 'u32[]', space=smem, size = 0x4, offset = 0x4, fixed_abs, tag = 'smem constant byte address 0x4 - core index']
  #allocation1 [shape = 'u32[144,128]{1,0:T(1,128)}', space=vmem, size = 0x12000, scoped, tag = 'internal scratch']
  %s0 = inlined_call_operand.hbm [shape: f32[8,500], index: 0, kind: input, shape index: {}]
  %s1 = inlined_call_operand.hbm [shape: f32[500,640], index: 1, kind: input, shape index: {}]
  %s2 = inlined_call_operand.hbm [shape: f32[1,640], index: 2, kind: input, shape index: {}]
  %s3 = inlined_call_operand.hbm [shape: f32[640,128], index: 3, kind: input, shape index: {}]
  %s4 = inlined_call_operand.vmem [shape: f32[8,128], index: 4, kind: output, shape index: {}]
  %s5 = sld [smem:[#allocation0]]
  $region42: #{simple_mlp_icentia.1} parent=0
    _
  %s7 = ssub.s32 1, %s5
  %s8 = scalar_select 0, %s7, %s5
  $region1: #{simple_mlp_icentia.1} parent=0
    #allocation2 [shape = 'u8[16384]{0}', space=vmem, size = 0x4000, scoped, tag = 'input window, operand 0, single buffered']
    #allocation3 [shape = 's32[1]{0}', space=sflag, size = 0x4, scoped, tag = 'scoped memory for simple_mlp_icentia.1']
    #allocation4 [shape = 'u8[1290240]{0}', space=vmem, size = 0x13b000, scoped, tag = 'input window, operand 1, single buffered']
    #allocation5 [shape = 's32[1]{0}', space=sflag, size = 0x4, scoped, tag = 'scoped memory for simple_mlp_icentia.1']
    #allocation6 [shape = 'u8[2560]{0}', space=vmem, size = 0xc00, scoped, tag = 'input window, operand 2, single buffered']
    #allocation7 [shape = 'u8[327680]{0}', space=vmem, size = 0x50000, scoped, tag = 'input window, operand 3, single buffered']
    #allocation8 [shape = 's32[1]{0}', space=sflag, size = 0x4, scoped, tag = 'scoped memory for simple_mlp_icentia.1']
    %9 = vsyncpa [#allocation3], 0
    %10 = vsyncpa [#allocation5], 0
    %11 = vsyncpa [#allocation8], 0
    // Predicated region
    $region2: #{simple_mlp_icentia.1} parent=1 // pred_check
      _
    $region3: #{simple_mlp_icentia.1} parent=1 // pred_check_branch
      %13 = sbr.rel (0) target = $region5
    $region4: #{simple_mlp_icentia.1} parent=1 // pred_region
      %s15 = ssub.s32 512, 512
      %16 = vsyncadd [#allocation3], %s15
      %s18 = sshll.u32 [#allocation2], 4
      %s19 = int_to_ptr.vmem [resolvable:$true] %s18
      %21 = dma.hbm_to_vmem [thread:$0]  %s0, 512, %s19, [#allocation3]
    $region5: #{simple_mlp_icentia.1} parent=1 // pred_fallthru
      _
    // Predicated region
    $region6: #{simple_mlp_icentia.1} parent=1 // pred_check
      _
    $region7: #{simple_mlp_icentia.1} parent=1 // pred_check_branch
      %23 = sbr.rel (0) target = $region9
    $region8: #{simple_mlp_icentia.1} parent=1 // pred_region
      %s25 = ssub.s32 40320, 40320
      %26 = vsyncadd [#allocation5], %s25
      %s27 = sshll.u32 [#allocation4], 4
      %s28 = int_to_ptr.vmem [resolvable:$true] %s27
      %33 = dma.hbm_to_vmem [thread:$0]  %s1, 40320, %s28, [#allocation5], 640, 640, 40
    $region9: #{simple_mlp_icentia.1} parent=1 // pred_fallthru
      _
    // Predicated region
    $region10: #{simple_mlp_icentia.1} parent=1 // pred_check
      _
    $region11: #{simple_mlp_icentia.1} parent=1 // pred_check_branch
      %35 = sbr.rel (0) target = $region13
    $region12: #{simple_mlp_icentia.1} parent=1 // pred_region
      %s37 = ssub.s32 80, 80
      %38 = vsyncadd [#allocation5], %s37
      %s40 = sshll.u32 [#allocation6], 4
      %s41 = int_to_ptr.vmem [resolvable:$true] %s40
      %43 = dma.hbm_to_vmem [thread:$0]  %s2, 80, %s41, [#allocation5]
    $region13: #{simple_mlp_icentia.1} parent=1 // pred_fallthru
      _
    // Predicated region
    $region14: #{simple_mlp_icentia.1} parent=1 // pred_check
      _
    $region15: #{simple_mlp_icentia.1} parent=1 // pred_check_branch
      %45 = sbr.rel (0) target = $region17
    $region16: #{simple_mlp_icentia.1} parent=1 // pred_region
      %s47 = ssub.s32 10240, 10240
      %48 = vsyncadd [#allocation8], %s47
      %s49 = sshll.u32 [#allocation7], 4
      %s50 = int_to_ptr.vmem [resolvable:$true] %s49
      %55 = dma.hbm_to_vmem [thread:$0]  %s3, 10240, %s50, [#allocation8], 128, 128, 8
    $region17: #{simple_mlp_icentia.1} parent=1 // pred_fallthru
      _
    // Predicated region
    $region18: #{simple_mlp_icentia.1} parent=1 // pred_check
      _
    $region19: #{simple_mlp_icentia.1} parent=1 // pred_check_branch
      %57 = sbr.rel (0) target = $region21
    $region20: #{simple_mlp_icentia.1} parent=1 // pred_region
      %58 = dma.done [#allocation3], 512
    $region21: #{simple_mlp_icentia.1} parent=1 // pred_fallthru
      _
    // Predicated region
    $region22: #{simple_mlp_icentia.1} parent=1 // pred_check
      _
    $region23: #{simple_mlp_icentia.1} parent=1 // pred_check_branch
      %60 = sbr.rel (0) target = $region25
    $region24: #{simple_mlp_icentia.1} parent=1 // pred_region
      %61 = dma.done [#allocation5], 40320
    $region25: #{simple_mlp_icentia.1} parent=1 // pred_fallthru
      _
    // Predicated region
    $region26: #{simple_mlp_icentia.1} parent=1 // pred_check
      _
    $region27: #{simple_mlp_icentia.1} parent=1 // pred_check_branch
      %63 = sbr.rel (0) target = $region29
    $region28: #{simple_mlp_icentia.1} parent=1 // pred_region
      %64 = dma.done [#allocation5], 80
    $region29: #{simple_mlp_icentia.1} parent=1 // pred_fallthru
      _
    // Predicated region
    $region30: #{simple_mlp_icentia.1} parent=1 // pred_check
      _
    $region31: #{simple_mlp_icentia.1} parent=1 // pred_check_branch
      %66 = sbr.rel (0) target = $region33
    $region32: #{simple_mlp_icentia.1} parent=1 // pred_region
      %67 = dma.done [#allocation8], 10240
    $region33: #{simple_mlp_icentia.1} parent=1 // pred_fallthru
      _
    %v68 = vld [vmem:[#allocation2] sm:$0xff]
    %v69 = vld [vmem:[#allocation2 + $0x8] sm:$0xff]
    %v70 = vld [vmem:[#allocation2 + $0x10] sm:$0xff]
    %v71 = vld [vmem:[#allocation2 + $0x18] sm:$0xff]
    %v72 = vld [vmem:[#allocation4] sm:$0xff]
    %v73 = vld [vmem:[#allocation4 + $0x8] sm:$0xff]
    %v74 = vld [vmem:[#allocation4 + $0x10] sm:$0xff]
    %v75 = vld [vmem:[#allocation4 + $0x18] sm:$0xff]
    %v76 = vld [vmem:[#allocation4 + $0x20] sm:$0xff]
    %v77 = vld [vmem:[#allocation4 + $0x28] sm:$0xff]
    %v78 = vld [vmem:[#allocation4 + $0x30] sm:$0xff]
    %v79 = vld [vmem:[#allocation4 + $0x38] sm:$0xff]
    %v80 = vld [vmem:[#allocation4 + $0x40] sm:$0xff]
    %v81 = vld [vmem:[#allocation4 + $0x48] sm:$0xff]
    %v82 = vld [vmem:[#allocation4 + $0x50] sm:$0xff]
    %v83 = vld [vmem:[#allocation4 + $0x58] sm:$0xff]
    %v84 = vld [vmem:[#allocation4 + $0x60] sm:$0xff]
    %v85 = vld [vmem:[#allocation4 + $0x68] sm:$0xff]
    %v86 = vld [vmem:[#allocation4 + $0x70] sm:$0xff]
    %v87 = vld [vmem:[#allocation4 + $0x78] sm:$0xff]
    %v88 = vld [vmem:[#allocation4 + $0x80] sm:$0xff]
    %v89 = vld [vmem:[#allocation4 + $0x88] sm:$0xff]
    %v90 = vld [vmem:[#allocation4 + $0x90] sm:$0xff]
    %v91 = vld [vmem:[#allocation4 + $0x98] sm:$0xff]
    %v92 = vld [vmem:[#allocation4 + $0xa0] sm:$0xff]
    %v93 = vld [vmem:[#allocation4 + $0xa8] sm:$0xff]
    %v94 = vld [vmem:[#allocation4 + $0xb0] sm:$0xff]
    %v95 = vld [vmem:[#allocation4 + $0xb8] sm:$0xff]
    %v96 = vld [vmem:[#allocation4 + $0xc0] sm:$0xff]
    %v97 = vld [vmem:[#allocation4 + $0xc8] sm:$0xff]
    %v98 = vld [vmem:[#allocation4 + $0xd0] sm:$0xff]
    %v99 = vld [vmem:[#allocation4 + $0xd8] sm:$0xff]
    %v100 = vld [vmem:[#allocation4 + $0xe0] sm:$0xff]
    %v101 = vld [vmem:[#allocation4 + $0xe8] sm:$0xff]
    %v102 = vld [vmem:[#allocation4 + $0xf0] sm:$0xff]
    %v103 = vld [vmem:[#allocation4 + $0xf8] sm:$0xff]
    %v104 = vld [vmem:[#allocation4 + $0x100] sm:$0xff]
    %v105 = vld [vmem:[#allocation4 + $0x108] sm:$0xff]
    %v106 = vld [vmem:[#allocation4 + $0x110] sm:$0xff]
    %v107 = vld [vmem:[#allocation4 + $0x118] sm:$0xff]
    %v108 = vld [vmem:[#allocation4 + $0x120] sm:$0xff]
    %v109 = vld [vmem:[#allocation4 + $0x128] sm:$0xff]
    %v110 = vld [vmem:[#allocation4 + $0x130] sm:$0xff]
    %v111 = vld [vmem:[#allocation4 + $0x138] sm:$0xff]
    %v112 = vld [vmem:[#allocation4 + $0x140] sm:$0xff]
    %v113 = vld [vmem:[#allocation4 + $0x148] sm:$0xff]
    %v114 = vld [vmem:[#allocation4 + $0x150] sm:$0xff]
    %v115 = vld [vmem:[#allocation4 + $0x158] sm:$0xff]
    %v116 = vld [vmem:[#allocation4 + $0x160] sm:$0xff]
    %v117 = vld [vmem:[#allocation4 + $0x168] sm:$0xff]
    %v118 = vld [vmem:[#allocation4 + $0x170] sm:$0xff]
    %v119 = vld [vmem:[#allocation4 + $0x178] sm:$0xff]
    %v120 = vld [vmem:[#allocation4 + $0x180] sm:$0xff]
    %v121 = vld [vmem:[#allocation4 + $0x188] sm:$0xff]
    %v122 = vld [vmem:[#allocation4 + $0x190] sm:$0xff]
    %v123 = vld [vmem:[#allocation4 + $0x198] sm:$0xff]
    %v124 = vld [vmem:[#allocation4 + $0x1a0] sm:$0xff]
    %v125 = vld [vmem:[#allocation4 + $0x1a8] sm:$0xff]
    %v126 = vld [vmem:[#allocation4 + $0x1b0] sm:$0xff]
    %v127 = vld [vmem:[#allocation4 + $0x1b8] sm:$0xff]
    %v128 = vld [vmem:[#allocation4 + $0x1c0] sm:$0xff]
    %v129 = vld [vmem:[#allocation4 + $0x1c8] sm:$0xff]
    %v130 = vld [vmem:[#allocation4 + $0x1d0] sm:$0xff]
    %v131 = vld [vmem:[#allocation4 + $0x1d8] sm:$0xff]
    %v132 = vld [vmem:[#allocation4 + $0x1e0] sm:$0xff]
    %v133 = vld [vmem:[#allocation4 + $0x1e8] sm:$0xff]
    %v134 = vld [vmem:[#allocation4 + $0x1f0] sm:$0xff]
    %v135 = vld [vmem:[#allocation4 + $0x1f8] sm:$0xff]
    %v136 = vld [vmem:[#allocation4 + $0x200] sm:$0xff]
    %v137 = vld [vmem:[#allocation4 + $0x208] sm:$0xff]
    %v138 = vld [vmem:[#allocation4 + $0x210] sm:$0xff]
    %v139 = vld [vmem:[#allocation4 + $0x218] sm:$0xff]
    %v140 = vld [vmem:[#allocation4 + $0x220] sm:$0xff]
    %v141 = vld [vmem:[#allocation4 + $0x228] sm:$0xff]
    %v142 = vld [vmem:[#allocation4 + $0x230] sm:$0xff]
    %v143 = vld [vmem:[#allocation4 + $0x238] sm:$0xff]
    %v144 = vld [vmem:[#allocation4 + $0x240] sm:$0xff]
    %v145 = vld [vmem:[#allocation4 + $0x248] sm:$0xff]
    %v146 = vld [vmem:[#allocation4 + $0x250] sm:$0xff]
    %v147 = vld [vmem:[#allocation4 + $0x258] sm:$0xff]
    %v148 = vld [vmem:[#allocation4 + $0x260] sm:$0xff]
    %v149 = vld [vmem:[#allocation4 + $0x268] sm:$0xff]
    %v150 = vld [vmem:[#allocation4 + $0x270] sm:$0xff]
    %v151 = vld [vmem:[#allocation4 + $0x278] sm:$0xff]
    %v152 = vld [vmem:[#allocation4 + $0x280] sm:$0xff]
    %v153 = vld [vmem:[#allocation4 + $0x288] sm:$0xff]
    %v154 = vld [vmem:[#allocation4 + $0x290] sm:$0xff]
    %v155 = vld [vmem:[#allocation4 + $0x298] sm:$0xff]
    %v156 = vld [vmem:[#allocation4 + $0x2a0] sm:$0xff]
    %v157 = vld [vmem:[#allocation4 + $0x2a8] sm:$0xff]
    %v158 = vld [vmem:[#allocation4 + $0x2b0] sm:$0xff]
    %v159 = vld [vmem:[#allocation4 + $0x2b8] sm:$0xff]
    %v160 = vld [vmem:[#allocation4 + $0x2c0] sm:$0xff]
    %v161 = vld [vmem:[#allocation4 + $0x2c8] sm:$0xff]
    %v162 = vld [vmem:[#allocation4 + $0x2d0] sm:$0xff]
    %v163 = vld [vmem:[#allocation4 + $0x2d8] sm:$0xff]
    %v164 = vld [vmem:[#allocation4 + $0x2e0] sm:$0xff]
    %v165 = vld [vmem:[#allocation4 + $0x2e8] sm:$0xff]
    %v166 = vld [vmem:[#allocation4 + $0x2f0] sm:$0xff]
    %v167 = vld [vmem:[#allocation4 + $0x2f8] sm:$0xff]
    %v168 = vld [vmem:[#allocation4 + $0x300] sm:$0xff]
    %v169 = vld [vmem:[#allocation4 + $0x308] sm:$0xff]
    %v170 = vld [vmem:[#allocation4 + $0x310] sm:$0xff]
    %v171 = vld [vmem:[#allocation4 + $0x318] sm:$0xff]
    %v172 = vld [vmem:[#allocation4 + $0x320] sm:$0xff]
    %v173 = vld [vmem:[#allocation4 + $0x328] sm:$0xff]
    %v174 = vld [vmem:[#allocation4 + $0x330] sm:$0xff]
    %v175 = vld [vmem:[#allocation4 + $0x338] sm:$0xff]
    %v176 = vld [vmem:[#allocation4 + $0x340] sm:$0xff]
    %v177 = vld [vmem:[#allocation4 + $0x348] sm:$0xff]
    %v178 = vld [vmem:[#allocation4 + $0x350] sm:$0xff]
    %v179 = vld [vmem:[#allocation4 + $0x358] sm:$0xff]
    %v180 = vld [vmem:[#allocation4 + $0x360] sm:$0xff]
    %v181 = vld [vmem:[#allocation4 + $0x368] sm:$0xff]
    %v182 = vld [vmem:[#allocation4 + $0x370] sm:$0xff]
    %v183 = vld [vmem:[#allocation4 + $0x378] sm:$0xff]
    %v184 = vld [vmem:[#allocation4 + $0x380] sm:$0xff]
    %v185 = vld [vmem:[#allocation4 + $0x388] sm:$0xff]
    %v186 = vld [vmem:[#allocation4 + $0x390] sm:$0xff]
    %v187 = vld [vmem:[#allocation4 + $0x398] sm:$0xff]
    %v188 = vld [vmem:[#allocation4 + $0x3a0] sm:$0xff]
    %v189 = vld [vmem:[#allocation4 + $0x3a8] sm:$0xff]
    %v190 = vld [vmem:[#allocation4 + $0x3b0] sm:$0xff]
    %v191 = vld [vmem:[#allocation4 + $0x3b8] sm:$0xff]
    %v192 = vld [vmem:[#allocation4 + $0x3c0] sm:$0xff]
    %v193 = vld [vmem:[#allocation4 + $0x3c8] sm:$0xff]
    %v194 = vld [vmem:[#allocation4 + $0x3d0] sm:$0xff]
    %v195 = vld [vmem:[#allocation4 + $0x3d8] sm:$0xff]
    %v196 = vld [vmem:[#allocation4 + $0x3e0] sm:$0xff]
    %v197 = vld [vmem:[#allocation4 + $0x3e8] sm:$0xff]
    %v198 = vld [vmem:[#allocation4 + $0x3f0] sm:$0xff]
    %v199 = vld [vmem:[#allocation4 + $0x3f8] sm:$0xff]
    %v200 = vld [vmem:[#allocation4 + $0x400] sm:$0xff]
    %v201 = vld [vmem:[#allocation4 + $0x408] sm:$0xff]
    %v202 = vld [vmem:[#allocation4 + $0x410] sm:$0xff]
    %v203 = vld [vmem:[#allocation4 + $0x418] sm:$0xff]
    %v204 = vld [vmem:[#allocation4 + $0x420] sm:$0xff]
    %v205 = vld [vmem:[#allocation4 + $0x428] sm:$0xff]
    %v206 = vld [vmem:[#allocation4 + $0x430] sm:$0xff]
    %v207 = vld [vmem:[#allocation4 + $0x438] sm:$0xff]
    %v208 = vld [vmem:[#allocation4 + $0x440] sm:$0xff]
    %v209 = vld [vmem:[#allocation4 + $0x448] sm:$0xff]
    %v210 = vld [vmem:[#allocation4 + $0x450] sm:$0xff]
    %v211 = vld [vmem:[#allocation4 + $0x458] sm:$0xff]
    %v212 = vld [vmem:[#allocation4 + $0x460] sm:$0xff]
    %v213 = vld [vmem:[#allocation4 + $0x468] sm:$0xff]
    %v214 = vld [vmem:[#allocation4 + $0x470] sm:$0xff]
    %v215 = vld [vmem:[#allocation4 + $0x478] sm:$0xff]
    %v216 = vld [vmem:[#allocation4 + $0x480] sm:$0xff]
    %v217 = vld [vmem:[#allocation4 + $0x488] sm:$0xff]
    %v218 = vld [vmem:[#allocation4 + $0x490] sm:$0xff]
    %v219 = vld [vmem:[#allocation4 + $0x498] sm:$0xff]
    %v220 = vld [vmem:[#allocation4 + $0x4a0] sm:$0xff]
    %v221 = vld [vmem:[#allocation4 + $0x4a8] sm:$0xff]
    %v222 = vld [vmem:[#allocation4 + $0x4b0] sm:$0xff]
    %v223 = vld [vmem:[#allocation4 + $0x4b8] sm:$0xff]
    %v224 = vld [vmem:[#allocation4 + $0x4c0] sm:$0xff]
    %v225 = vld [vmem:[#allocation4 + $0x4c8] sm:$0xff]
    %v226 = vld [vmem:[#allocation4 + $0x4d0] sm:$0xff]
    %v227 = vld [vmem:[#allocation4 + $0x4d8] sm:$0xff]
    %v228 = vld [vmem:[#allocation4 + $0x4e0] sm:$0xff]
    %v229 = vld [vmem:[#allocation4 + $0x4e8] sm:$0xff]
    %v230 = vld [vmem:[#allocation4 + $0x4f0] sm:$0xff]
    %v231 = vld [vmem:[#allocation4 + $0x4f8] sm:$0xff]
    %v232 = vld [vmem:[#allocation4 + $0x500] sm:$0xff]
    %v233 = vld [vmem:[#allocation4 + $0x508] sm:$0xff]
    %v234 = vld [vmem:[#allocation4 + $0x510] sm:$0xff]
    %v235 = vld [vmem:[#allocation4 + $0x518] sm:$0xff]
    %v236 = vld [vmem:[#allocation4 + $0x520] sm:$0xff]
    %v237 = vld [vmem:[#allocation4 + $0x528] sm:$0xff]
    %v238 = vld [vmem:[#allocation4 + $0x530] sm:$0xff]
    %v239 = vld [vmem:[#allocation4 + $0x538] sm:$0xff]
    %v240 = vld [vmem:[#allocation4 + $0x540] sm:$0xff]
    %v241 = vld [vmem:[#allocation4 + $0x548] sm:$0xff]
    %v242 = vld [vmem:[#allocation4 + $0x550] sm:$0xff]
    %v243 = vld [vmem:[#allocation4 + $0x558] sm:$0xff]
    %v244 = vld [vmem:[#allocation4 + $0x560] sm:$0xff]
    %v245 = vld [vmem:[#allocation4 + $0x568] sm:$0xff]
    %v246 = vld [vmem:[#allocation4 + $0x570] sm:$0xff]
    %v247 = vld [vmem:[#allocation4 + $0x578] sm:$0xff]
    %v248 = vld [vmem:[#allocation4 + $0x580] sm:$0xff]
    %v249 = vld [vmem:[#allocation4 + $0x588] sm:$0xff]
    %v250 = vld [vmem:[#allocation4 + $0x590] sm:$0xff]
    %v251 = vld [vmem:[#allocation4 + $0x598] sm:$0xff]
    %v252 = vld [vmem:[#allocation4 + $0x5a0] sm:$0xff]
    %v253 = vld [vmem:[#allocation4 + $0x5a8] sm:$0xff]
    %v254 = vld [vmem:[#allocation4 + $0x5b0] sm:$0xff]
    %v255 = vld [vmem:[#allocation4 + $0x5b8] sm:$0xff]
    %v256 = vld [vmem:[#allocation4 + $0x5c0] sm:$0xff]
    %v257 = vld [vmem:[#allocation4 + $0x5c8] sm:$0xff]
    %v258 = vld [vmem:[#allocation4 + $0x5d0] sm:$0xff]
    %v259 = vld [vmem:[#allocation4 + $0x5d8] sm:$0xff]
    %v260 = vld [vmem:[#allocation4 + $0x5e0] sm:$0xff]
    %v261 = vld [vmem:[#allocation4 + $0x5e8] sm:$0xff]
    %v262 = vld [vmem:[#allocation4 + $0x5f0] sm:$0xff]
    %v263 = vld [vmem:[#allocation4 + $0x5f8] sm:$0xff]
    %v264 = vld [vmem:[#allocation4 + $0x600] sm:$0xff]
    %v265 = vld [vmem:[#allocation4 + $0x608] sm:$0xff]
    %v266 = vld [vmem:[#allocation4 + $0x610] sm:$0xff]
    %v267 = vld [vmem:[#allocation4 + $0x618] sm:$0xff]
    %v268 = vld [vmem:[#allocation4 + $0x620] sm:$0xff]
    %v269 = vld [vmem:[#allocation4 + $0x628] sm:$0xff]
    %v270 = vld [vmem:[#allocation4 + $0x630] sm:$0xff]
    %v271 = vld [vmem:[#allocation4 + $0x638] sm:$0xff]
    %v272 = vld [vmem:[#allocation4 + $0x640] sm:$0xff]
    %v273 = vld [vmem:[#allocation4 + $0x648] sm:$0xff]
    %v274 = vld [vmem:[#allocation4 + $0x650] sm:$0xff]
    %v275 = vld [vmem:[#allocation4 + $0x658] sm:$0xff]
    %v276 = vld [vmem:[#allocation4 + $0x660] sm:$0xff]
    %v277 = vld [vmem:[#allocation4 + $0x668] sm:$0xff]
    %v278 = vld [vmem:[#allocation4 + $0x670] sm:$0xff]
    %v279 = vld [vmem:[#allocation4 + $0x678] sm:$0xff]
    %v280 = vld [vmem:[#allocation4 + $0x680] sm:$0xff]
    %v281 = vld [vmem:[#allocation4 + $0x688] sm:$0xff]
    %v282 = vld [vmem:[#allocation4 + $0x690] sm:$0xff]
    %v283 = vld [vmem:[#allocation4 + $0x698] sm:$0xff]
    %v284 = vld [vmem:[#allocation4 + $0x6a0] sm:$0xff]
    %v285 = vld [vmem:[#allocation4 + $0x6a8] sm:$0xff]
    %v286 = vld [vmem:[#allocation4 + $0x6b0] sm:$0xff]
    %v287 = vld [vmem:[#allocation4 + $0x6b8] sm:$0xff]
    %v288 = vld [vmem:[#allocation4 + $0x6c0] sm:$0xff]
    %v289 = vld [vmem:[#allocation4 + $0x6c8] sm:$0xff]
    %v290 = vld [vmem:[#allocation4 + $0x6d0] sm:$0xff]
    %v291 = vld [vmem:[#allocation4 + $0x6d8] sm:$0xff]
    %v292 = vld [vmem:[#allocation4 + $0x6e0] sm:$0xff]
    %v293 = vld [vmem:[#allocation4 + $0x6e8] sm:$0xff]
    %v294 = vld [vmem:[#allocation4 + $0x6f0] sm:$0xff]
    %v295 = vld [vmem:[#allocation4 + $0x6f8] sm:$0xff]
    %v296 = vld [vmem:[#allocation4 + $0x700] sm:$0xff]
    %v297 = vld [vmem:[#allocation4 + $0x708] sm:$0xff]
    %v298 = vld [vmem:[#allocation4 + $0x710] sm:$0xff]
    %v299 = vld [vmem:[#allocation4 + $0x718] sm:$0xff]
    %v300 = vld [vmem:[#allocation4 + $0x720] sm:$0xff]
    %v301 = vld [vmem:[#allocation4 + $0x728] sm:$0xff]
    %v302 = vld [vmem:[#allocation4 + $0x730] sm:$0xff]
    %v303 = vld [vmem:[#allocation4 + $0x738] sm:$0xff]
    %v304 = vld [vmem:[#allocation4 + $0x740] sm:$0xff]
    %v305 = vld [vmem:[#allocation4 + $0x748] sm:$0xff]
    %v306 = vld [vmem:[#allocation4 + $0x750] sm:$0xff]
    %v307 = vld [vmem:[#allocation4 + $0x758] sm:$0xff]
    %v308 = vld [vmem:[#allocation4 + $0x760] sm:$0xff]
    %v309 = vld [vmem:[#allocation4 + $0x768] sm:$0xff]
    %v310 = vld [vmem:[#allocation4 + $0x770] sm:$0xff]
    %v311 = vld [vmem:[#allocation4 + $0x778] sm:$0xff]
    %v312 = vld [vmem:[#allocation4 + $0x780] sm:$0xff]
    %v313 = vld [vmem:[#allocation4 + $0x788] sm:$0xff]
    %v314 = vld [vmem:[#allocation4 + $0x790] sm:$0xff]
    %v315 = vld [vmem:[#allocation4 + $0x798] sm:$0xff]
    %v316 = vld [vmem:[#allocation4 + $0x7a0] sm:$0xff]
    %v317 = vld [vmem:[#allocation4 + $0x7a8] sm:$0xff]
    %v318 = vld [vmem:[#allocation4 + $0x7b0] sm:$0xff]
    %v319 = vld [vmem:[#allocation4 + $0x7b8] sm:$0xff]
    %v320 = vld [vmem:[#allocation4 + $0x7c0] sm:$0xff]
    %v321 = vld [vmem:[#allocation4 + $0x7c8] sm:$0xff]
    %v322 = vld [vmem:[#allocation4 + $0x7d0] sm:$0xff]
    %v323 = vld [vmem:[#allocation4 + $0x7d8] sm:$0xff]
    %v324 = vld [vmem:[#allocation4 + $0x7e0] sm:$0xff]
    %v325 = vld [vmem:[#allocation4 + $0x7e8] sm:$0xff]
    %v326 = vld [vmem:[#allocation4 + $0x7f0] sm:$0xff]
    %v327 = vld [vmem:[#allocation4 + $0x7f8] sm:$0xff]
    %v328 = vld [vmem:[#allocation4 + $0x800] sm:$0xff]
    %v329 = vld [vmem:[#allocation4 + $0x808] sm:$0xff]
    %v330 = vld [vmem:[#allocation4 + $0x810] sm:$0xff]
    %v331 = vld [vmem:[#allocation4 + $0x818] sm:$0xff]
    %v332 = vld [vmem:[#allocation4 + $0x820] sm:$0xff]
    %v333 = vld [vmem:[#allocation4 + $0x828] sm:$0xff]
    %v334 = vld [vmem:[#allocation4 + $0x830] sm:$0xff]
    %v335 = vld [vmem:[#allocation4 + $0x838] sm:$0xff]
    %v336 = vld [vmem:[#allocation4 + $0x840] sm:$0xff]
    %v337 = vld [vmem:[#allocation4 + $0x848] sm:$0xff]
    %v338 = vld [vmem:[#allocation4 + $0x850] sm:$0xff]
    %v339 = vld [vmem:[#allocation4 + $0x858] sm:$0xff]
    %v340 = vld [vmem:[#allocation4 + $0x860] sm:$0xff]
    %v341 = vld [vmem:[#allocation4 + $0x868] sm:$0xff]
    %v342 = vld [vmem:[#allocation4 + $0x870] sm:$0xff]
    %v343 = vld [vmem:[#allocation4 + $0x878] sm:$0xff]
    %v344 = vld [vmem:[#allocation4 + $0x880] sm:$0xff]
    %v345 = vld [vmem:[#allocation4 + $0x888] sm:$0xff]
    %v346 = vld [vmem:[#allocation4 + $0x890] sm:$0xff]
    %v347 = vld [vmem:[#allocation4 + $0x898] sm:$0xff]
    %v348 = vld [vmem:[#allocation4 + $0x8a0] sm:$0xff]
    %v349 = vld [vmem:[#allocation4 + $0x8a8] sm:$0xff]
    %v350 = vld [vmem:[#allocation4 + $0x8b0] sm:$0xff]
    %v351 = vld [vmem:[#allocation4 + $0x8b8] sm:$0xff]
    %v352 = vld [vmem:[#allocation4 + $0x8c0] sm:$0xff]
    %v353 = vld [vmem:[#allocation4 + $0x8c8] sm:$0xff]
    %v354 = vld [vmem:[#allocation4 + $0x8d0] sm:$0xff]
    %v355 = vld [vmem:[#allocation4 + $0x8d8] sm:$0xff]
    %v356 = vld [vmem:[#allocation4 + $0x8e0] sm:$0xff]
    %v357 = vld [vmem:[#allocation4 + $0x8e8] sm:$0xff]
    %v358 = vld [vmem:[#allocation4 + $0x8f0] sm:$0xff]
    %v359 = vld [vmem:[#allocation4 + $0x8f8] sm:$0xff]
    %v360 = vld [vmem:[#allocation4 + $0x900] sm:$0xff]
    %v361 = vld [vmem:[#allocation4 + $0x908] sm:$0xff]
    %v362 = vld [vmem:[#allocation4 + $0x910] sm:$0xff]
    %v363 = vld [vmem:[#allocation4 + $0x918] sm:$0xff]
    %v364 = vld [vmem:[#allocation4 + $0x920] sm:$0xff]
    %v365 = vld [vmem:[#allocation4 + $0x928] sm:$0xff]
    %v366 = vld [vmem:[#allocation4 + $0x930] sm:$0xff]
    %v367 = vld [vmem:[#allocation4 + $0x938] sm:$0xff]
    %v368 = vld [vmem:[#allocation4 + $0x940] sm:$0xff]
    %v369 = vld [vmem:[#allocation4 + $0x948] sm:$0xff]
    %v370 = vld [vmem:[#allocation4 + $0x950] sm:$0xff]
    %v371 = vld [vmem:[#allocation4 + $0x958] sm:$0xff]
    %v372 = vld [vmem:[#allocation4 + $0x960] sm:$0xff]
    %v373 = vld [vmem:[#allocation4 + $0x968] sm:$0xff]
    %v374 = vld [vmem:[#allocation4 + $0x970] sm:$0xff]
    %v375 = vld [vmem:[#allocation4 + $0x978] sm:$0xff]
    %v376 = vld [vmem:[#allocation4 + $0x980] sm:$0xff]
    %v377 = vld [vmem:[#allocation4 + $0x988] sm:$0xff]
    %v378 = vld [vmem:[#allocation4 + $0x990] sm:$0xff]
    %v379 = vld [vmem:[#allocation4 + $0x998] sm:$0xff]
    %v380 = vld [vmem:[#allocation4 + $0x9a0] sm:$0xff]
    %v381 = vld [vmem:[#allocation4 + $0x9a8] sm:$0xff]
    %v382 = vld [vmem:[#allocation4 + $0x9b0] sm:$0xf]
    %v383 = vld [vmem:[#allocation4 + $0x9b8] sm:$0xf]
    %v384 = vld [vmem:[#allocation4 + $0x9c0] sm:$0xf]
    %v385 = vld [vmem:[#allocation4 + $0x9c8] sm:$0xf]
    %v386 = vld [vmem:[#allocation4 + $0x9d0] sm:$0xf]
    %v387 = vld [vmem:[#allocation6] sm:$0x1f]
    %v389 = vlaneseq
    %v390 = vshrl.u32 %v389, 7
    %v391 = vsub.s32 0, %v390
    %v392 = vrot.slane %v387, %v391
    %v393 = vlaneseq
    %v394 = vshrl.u32 %v393, 7
    %v395 = vsub.s32 1, %v394
    %v396 = vrot.slane %v387, %v395
    %v397 = vlaneseq
    %v398 = vshrl.u32 %v397, 7
    %v399 = vsub.s32 2, %v398
    %v400 = vrot.slane %v387, %v399
    %v401 = vlaneseq
    %v402 = vshrl.u32 %v401, 7
    %v403 = vsub.s32 3, %v402
    %v404 = vrot.slane %v387, %v403
    %v405 = vlaneseq
    %v406 = vshrl.u32 %v405, 7
    %v407 = vsub.s32 4, %v406
    %v408 = vrot.slane %v387, %v407
    %vm414 = vcmask 949248
    %v416 = vsel %vm414, %v71, 0
    %vm418 = vcmask 1043456
    %v420 = vsel %vm418, %v382, 0
    %v423 = vsel %vm418, %v383, 0
    %v426 = vsel %vm418, %v384, 0
    %v429 = vsel %vm418, %v385, 0
    %v432 = vsel %vm418, %v386, 0
    %434 = vmatprep.subr.mxu0 %v148
    %435 = vmatpush1.msra.mxu0 %v147
    %436 = vmatprep.subr.mxu0 %v143
    %437 = vmatpush1.msra.mxu0 %v142
    %438 = vmatprep.subr.mxu0 %v138
    %439 = vmatpush1.msra.mxu0 %v137
    %440 = vmatprep.subr.mxu0 %v133
    %441 = vmatpush1.msra.mxu0 %v132
    %442 = vmatprep.subr.mxu0 %v128
    %443 = vmatpush1.msra.mxu0 %v127
    %444 = vmatprep.subr.mxu0 %v123
    %445 = vmatpush1.msra.mxu0 %v122
    %446 = vmatprep.subr.mxu0 %v118
    %447 = vmatpush1.msra.mxu0 %v117
    %448 = vmatprep.subr.mxu0 %v113
    %449 = vmatpush1.msra.mxu0 %v112
    %450 = vmatprep.subr.mxu0 %v108
    %451 = vmatpush1.msra.mxu0 %v107
    %452 = vmatprep.subr.mxu0 %v103
    %453 = vmatpush1.msra.mxu0 %v102
    %454 = vmatprep.subr.mxu0 %v98
    %455 = vmatpush1.msra.mxu0 %v97
    %456 = vmatprep.subr.mxu0 %v93
    %457 = vmatpush1.msra.mxu0 %v92
    %458 = vmatprep.subr.mxu0 %v88
    %459 = vmatpush1.msra.mxu0 %v87
    %460 = vmatprep.subr.mxu0 %v83
    %461 = vmatpush1.msra.mxu0 %v82
    %462 = vmatprep.subr.mxu0 %v78
    %463 = vmatpush1.msra.mxu0 %v77
    %464 = vmatprep.subr.mxu0 %v73
    %465 = vmatpush1.msra.mxu0 %v72
    %466 = vmatprep.subr.mxu0 %v228
    %467 = vmatpush2.msra.mxu0 %v227
    %468 = vmatprep.subr.mxu0 %v223
    %469 = vmatpush2.msra.mxu0 %v222
    %470 = vmatprep.subr.mxu0 %v218
    %471 = vmatpush2.msra.mxu0 %v217
    %472 = vmatprep.subr.mxu0 %v213
    %473 = vmatpush2.msra.mxu0 %v212
    %474 = vmatprep.subr.mxu0 %v208
    %475 = vmatpush2.msra.mxu0 %v207
    %476 = vmatprep.subr.mxu0 %v203
    %477 = vmatpush2.msra.mxu0 %v202
    %478 = vmatprep.subr.mxu0 %v198
    %479 = vmatpush2.msra.mxu0 %v197
    %480 = vmatprep.subr.mxu0 %v193
    %481 = vmatpush2.msra.mxu0 %v192
    %482 = vmatprep.subr.mxu0 %v188
    %483 = vmatpush2.msra.mxu0 %v187
    %484 = vmatprep.subr.mxu0 %v183
    %485 = vmatpush2.msra.mxu0 %v182
    %486 = vmatprep.subr.mxu0 %v178
    %487 = vmatpush2.msra.mxu0 %v177
    %488 = vmatprep.subr.mxu0 %v173
    %489 = vmatpush2.msra.mxu0 %v172
    %490 = vmatprep.subr.mxu0 %v168
    %491 = vmatpush2.msra.mxu0 %v167
    %492 = vmatprep.subr.mxu0 %v163
    %493 = vmatpush2.msra.mxu0 %v162
    %494 = vmatprep.subr.mxu0 %v158
    %495 = vmatpush2.msra.mxu0 %v157
    %496 = vmatprep.subr.mxu0 %v153
    %497 = vmatpush2.msra.mxu0 %v152
    %498 = vmatprep.mubr.f32.mxu0 %v69
    %499 = vmatmul.mubr.f32.gmra.mxu0 %v68
    %v500 = vpop.f32.mrf.mxu0
    %v501 = vadd.f32 %v392, %v500
    %v502 = vpop.f32.mrf.mxu0
    %v503 = vadd.f32 %v396, %v502
    %504 = vdwg.mxu0
    %505 = vmatprep.subr.mxu0 %v308
    %506 = vmatpush1.msra.mxu0 %v307
    %507 = vmatprep.subr.mxu0 %v303
    %508 = vmatpush1.msra.mxu0 %v302
    %509 = vmatprep.subr.mxu0 %v298
    %510 = vmatpush1.msra.mxu0 %v297
    %511 = vmatprep.subr.mxu0 %v293
    %512 = vmatpush1.msra.mxu0 %v292
    %513 = vmatprep.subr.mxu0 %v288
    %514 = vmatpush1.msra.mxu0 %v287
    %515 = vmatprep.subr.mxu0 %v283
    %516 = vmatpush1.msra.mxu0 %v282
    %517 = vmatprep.subr.mxu0 %v278
    %518 = vmatpush1.msra.mxu0 %v277
    %519 = vmatprep.subr.mxu0 %v273
    %520 = vmatpush1.msra.mxu0 %v272
    %521 = vmatprep.subr.mxu0 %v268
    %522 = vmatpush1.msra.mxu0 %v267
    %523 = vmatprep.subr.mxu0 %v263
    %524 = vmatpush1.msra.mxu0 %v262
    %525 = vmatprep.subr.mxu0 %v258
    %526 = vmatpush1.msra.mxu0 %v257
    %527 = vmatprep.subr.mxu0 %v253
    %528 = vmatpush1.msra.mxu0 %v252
    %529 = vmatprep.subr.mxu0 %v248
    %530 = vmatpush1.msra.mxu0 %v247
    %531 = vmatprep.subr.mxu0 %v243
    %532 = vmatpush1.msra.mxu0 %v242
    %533 = vmatprep.subr.mxu0 %v238
    %534 = vmatpush1.msra.mxu0 %v237
    %535 = vmatprep.subr.mxu0 %v233
    %536 = vmatpush1.msra.mxu0 %v232
    %537 = vmatprep.subr.mxu0 0.0
    %538 = vmatpush2.msra.mxu0 0.0
    %539 = vmatprep.subr.mxu0 %v423
    %540 = vmatpush2.msra.mxu0 %v420
    %541 = vmatprep.subr.mxu0 %v378
    %542 = vmatpush2.msra.mxu0 %v377
    %543 = vmatprep.subr.mxu0 %v373
    %544 = vmatpush2.msra.mxu0 %v372
    %545 = vmatprep.subr.mxu0 %v368
    %546 = vmatpush2.msra.mxu0 %v367
    %547 = vmatprep.subr.mxu0 %v363
    %548 = vmatpush2.msra.mxu0 %v362
    %549 = vmatprep.subr.mxu0 %v358
    %550 = vmatpush2.msra.mxu0 %v357
    %551 = vmatprep.subr.mxu0 %v353
    %552 = vmatpush2.msra.mxu0 %v352
    %553 = vmatprep.subr.mxu0 %v348
    %554 = vmatpush2.msra.mxu0 %v347
    %555 = vmatprep.subr.mxu0 %v343
    %556 = vmatpush2.msra.mxu0 %v342
    %557 = vmatprep.subr.mxu0 %v338
    %558 = vmatpush2.msra.mxu0 %v337
    %559 = vmatprep.subr.mxu0 %v333
    %560 = vmatpush2.msra.mxu0 %v332
    %561 = vmatprep.subr.mxu0 %v328
    %562 = vmatpush2.msra.mxu0 %v327
    %563 = vmatprep.subr.mxu0 %v323
    %564 = vmatpush2.msra.mxu0 %v322
    %565 = vmatprep.subr.mxu0 %v318
    %566 = vmatpush2.msra.mxu0 %v317
    %567 = vmatprep.subr.mxu0 %v313
    %568 = vmatpush2.msra.mxu0 %v312
    %569 = vmatprep.mubr.f32.mxu0 %v416
    %570 = vmatmul.mubr.f32.gmra.mxu0 %v70
    %v571 = vpop.f32.mrf.mxu0
    %v572 = vadd.f32 %v501, %v571
    %v573 = vpop.f32.mrf.mxu0
    %v574 = vadd.f32 %v503, %v573
    %575 = vdwg.mxu0
    %576 = vmatprep.subr.mxu0 %v150
    %577 = vmatpush1.msra.mxu0 %v149
    %578 = vmatprep.subr.mxu0 %v145
    %579 = vmatpush1.msra.mxu0 %v144
    %580 = vmatprep.subr.mxu0 %v140
    %581 = vmatpush1.msra.mxu0 %v139
    %582 = vmatprep.subr.mxu0 %v135
    %583 = vmatpush1.msra.mxu0 %v134
    %584 = vmatprep.subr.mxu0 %v130
    %585 = vmatpush1.msra.mxu0 %v129
    %586 = vmatprep.subr.mxu0 %v125
    %587 = vmatpush1.msra.mxu0 %v124
    %588 = vmatprep.subr.mxu0 %v120
    %589 = vmatpush1.msra.mxu0 %v119
    %590 = vmatprep.subr.mxu0 %v115
    %591 = vmatpush1.msra.mxu0 %v114
    %592 = vmatprep.subr.mxu0 %v110
    %593 = vmatpush1.msra.mxu0 %v109
    %594 = vmatprep.subr.mxu0 %v105
    %595 = vmatpush1.msra.mxu0 %v104
    %596 = vmatprep.subr.mxu0 %v100
    %597 = vmatpush1.msra.mxu0 %v99
    %598 = vmatprep.subr.mxu0 %v95
    %599 = vmatpush1.msra.mxu0 %v94
    %600 = vmatprep.subr.mxu0 %v90
    %601 = vmatpush1.msra.mxu0 %v89
    %602 = vmatprep.subr.mxu0 %v85
    %603 = vmatpush1.msra.mxu0 %v84
    %604 = vmatprep.subr.mxu0 %v80
    %605 = vmatpush1.msra.mxu0 %v79
    %606 = vmatprep.subr.mxu0 %v75
    %607 = vmatpush1.msra.mxu0 %v74
    %608 = vmatprep.subr.mxu0 %v230
    %609 = vmatpush2.msra.mxu0 %v229
    %610 = vmatprep.subr.mxu0 %v225
    %611 = vmatpush2.msra.mxu0 %v224
    %612 = vmatprep.subr.mxu0 %v220
    %613 = vmatpush2.msra.mxu0 %v219
    %614 = vmatprep.subr.mxu0 %v215
    %615 = vmatpush2.msra.mxu0 %v214
    %616 = vmatprep.subr.mxu0 %v210
    %617 = vmatpush2.msra.mxu0 %v209
    %618 = vmatprep.subr.mxu0 %v205
    %619 = vmatpush2.msra.mxu0 %v204
    %620 = vmatprep.subr.mxu0 %v200
    %621 = vmatpush2.msra.mxu0 %v199
    %622 = vmatprep.subr.mxu0 %v195
    %623 = vmatpush2.msra.mxu0 %v194
    %624 = vmatprep.subr.mxu0 %v190
    %625 = vmatpush2.msra.mxu0 %v189
    %626 = vmatprep.subr.mxu0 %v185
    %627 = vmatpush2.msra.mxu0 %v184
    %628 = vmatprep.subr.mxu0 %v180
    %629 = vmatpush2.msra.mxu0 %v179
    %630 = vmatprep.subr.mxu0 %v175
    %631 = vmatpush2.msra.mxu0 %v174
    %632 = vmatprep.subr.mxu0 %v170
    %633 = vmatpush2.msra.mxu0 %v169
    %634 = vmatprep.subr.mxu0 %v165
    %635 = vmatpush2.msra.mxu0 %v164
    %636 = vmatprep.subr.mxu0 %v160
    %637 = vmatpush2.msra.mxu0 %v159
    %638 = vmatprep.subr.mxu0 %v155
    %639 = vmatpush2.msra.mxu0 %v154
    %640 = vmatprep.mubr.f32.mxu0 %v69
    %641 = vmatmul.mubr.f32.gmra.mxu0 %v68
    %v642 = vpop.f32.mrf.mxu0
    %v643 = vadd.f32 %v400, %v642
    %v644 = vpop.f32.mrf.mxu0
    %v645 = vadd.f32 %v404, %v644
    %646 = vdwg.mxu0
    %647 = vmatprep.subr.mxu0 %v310
    %648 = vmatpush1.msra.mxu0 %v309
    %649 = vmatprep.subr.mxu0 %v305
    %650 = vmatpush1.msra.mxu0 %v304
    %651 = vmatprep.subr.mxu0 %v300
    %652 = vmatpush1.msra.mxu0 %v299
    %653 = vmatprep.subr.mxu0 %v295
    %654 = vmatpush1.msra.mxu0 %v294
    %655 = vmatprep.subr.mxu0 %v290
    %656 = vmatpush1.msra.mxu0 %v289
    %657 = vmatprep.subr.mxu0 %v285
    %658 = vmatpush1.msra.mxu0 %v284
    %659 = vmatprep.subr.mxu0 %v280
    %660 = vmatpush1.msra.mxu0 %v279
    %661 = vmatprep.subr.mxu0 %v275
    %662 = vmatpush1.msra.mxu0 %v274
    %663 = vmatprep.subr.mxu0 %v270
    %664 = vmatpush1.msra.mxu0 %v269
    %665 = vmatprep.subr.mxu0 %v265
    %666 = vmatpush1.msra.mxu0 %v264
    %667 = vmatprep.subr.mxu0 %v260
    %668 = vmatpush1.msra.mxu0 %v259
    %669 = vmatprep.subr.mxu0 %v255
    %670 = vmatpush1.msra.mxu0 %v254
    %671 = vmatprep.subr.mxu0 %v250
    %672 = vmatpush1.msra.mxu0 %v249
    %673 = vmatprep.subr.mxu0 %v245
    %674 = vmatpush1.msra.mxu0 %v244
    %675 = vmatprep.subr.mxu0 %v240
    %676 = vmatpush1.msra.mxu0 %v239
    %677 = vmatprep.subr.mxu0 %v235
    %678 = vmatpush1.msra.mxu0 %v234
    %679 = vmatprep.subr.mxu0 0.0
    %680 = vmatpush2.msra.mxu0 0.0
    %681 = vmatprep.subr.mxu0 %v429
    %682 = vmatpush2.msra.mxu0 %v426
    %683 = vmatprep.subr.mxu0 %v380
    %684 = vmatpush2.msra.mxu0 %v379
    %685 = vmatprep.subr.mxu0 %v375
    %686 = vmatpush2.msra.mxu0 %v374
    %687 = vmatprep.subr.mxu0 %v370
    %688 = vmatpush2.msra.mxu0 %v369
    %689 = vmatprep.subr.mxu0 %v365
    %690 = vmatpush2.msra.mxu0 %v364
    %691 = vmatprep.subr.mxu0 %v360
    %692 = vmatpush2.msra.mxu0 %v359
    %693 = vmatprep.subr.mxu0 %v355
    %694 = vmatpush2.msra.mxu0 %v354
    %695 = vmatprep.subr.mxu0 %v350
    %696 = vmatpush2.msra.mxu0 %v349
    %697 = vmatprep.subr.mxu0 %v345
    %698 = vmatpush2.msra.mxu0 %v344
    %699 = vmatprep.subr.mxu0 %v340
    %700 = vmatpush2.msra.mxu0 %v339
    %701 = vmatprep.subr.mxu0 %v335
    %702 = vmatpush2.msra.mxu0 %v334
    %703 = vmatprep.subr.mxu0 %v330
    %704 = vmatpush2.msra.mxu0 %v329
    %705 = vmatprep.subr.mxu0 %v325
    %706 = vmatpush2.msra.mxu0 %v324
    %707 = vmatprep.subr.mxu0 %v320
    %708 = vmatpush2.msra.mxu0 %v319
    %709 = vmatprep.subr.mxu0 %v315
    %710 = vmatpush2.msra.mxu0 %v314
    %711 = vmatprep.mubr.f32.mxu0 %v416
    %712 = vmatmul.mubr.f32.gmra.mxu0 %v70
    %v713 = vpop.f32.mrf.mxu0
    %v714 = vadd.f32 %v643, %v713
    %v715 = vpop.f32.mrf.mxu0
    %v716 = vadd.f32 %v645, %v715
    %717 = vdwg.mxu0
    %718 = vmatprep.subr.mxu0 0.0
    %719 = vmatpush1.msra.mxu0 %v151
    %720 = vmatprep.subr.mxu0 0.0
    %721 = vmatpush1.msra.mxu0 %v146
    %722 = vmatprep.subr.mxu0 0.0
    %723 = vmatpush1.msra.mxu0 %v141
    %724 = vmatprep.subr.mxu0 0.0
    %725 = vmatpush1.msra.mxu0 %v136
    %726 = vmatprep.subr.mxu0 0.0
    %727 = vmatpush1.msra.mxu0 %v131
    %728 = vmatprep.subr.mxu0 0.0
    %729 = vmatpush1.msra.mxu0 %v126
    %730 = vmatprep.subr.mxu0 0.0
    %731 = vmatpush1.msra.mxu0 %v121
    %732 = vmatprep.subr.mxu0 0.0
    %733 = vmatpush1.msra.mxu0 %v116
    %734 = vmatprep.subr.mxu0 0.0
    %735 = vmatpush1.msra.mxu0 %v111
    %736 = vmatprep.subr.mxu0 0.0
    %737 = vmatpush1.msra.mxu0 %v106
    %738 = vmatprep.subr.mxu0 0.0
    %739 = vmatpush1.msra.mxu0 %v101
    %740 = vmatprep.subr.mxu0 0.0
    %741 = vmatpush1.msra.mxu0 %v96
    %742 = vmatprep.subr.mxu0 0.0
    %743 = vmatpush1.msra.mxu0 %v91
    %744 = vmatprep.subr.mxu0 0.0
    %745 = vmatpush1.msra.mxu0 %v86
    %746 = vmatprep.subr.mxu0 0.0
    %747 = vmatpush1.msra.mxu0 %v81
    %748 = vmatprep.subr.mxu0 0.0
    %749 = vmatpush1.msra.mxu0 %v76
    %750 = vmatprep.subr.mxu0 0.0
    %751 = vmatpush2.msra.mxu0 %v231
    %752 = vmatprep.subr.mxu0 0.0
    %753 = vmatpush2.msra.mxu0 %v226
    %754 = vmatprep.subr.mxu0 0.0
    %755 = vmatpush2.msra.mxu0 %v221
    %756 = vmatprep.subr.mxu0 0.0
    %757 = vmatpush2.msra.mxu0 %v216
    %758 = vmatprep.subr.mxu0 0.0
    %759 = vmatpush2.msra.mxu0 %v211
    %760 = vmatprep.subr.mxu0 0.0
    %761 = vmatpush2.msra.mxu0 %v206
    %762 = vmatprep.subr.mxu0 0.0
    %763 = vmatpush2.msra.mxu0 %v201
    %764 = vmatprep.subr.mxu0 0.0
    %765 = vmatpush2.msra.mxu0 %v196
    %766 = vmatprep.subr.mxu0 0.0
    %767 = vmatpush2.msra.mxu0 %v191
    %768 = vmatprep.subr.mxu0 0.0
    %769 = vmatpush2.msra.mxu0 %v186
    %770 = vmatprep.subr.mxu0 0.0
    %771 = vmatpush2.msra.mxu0 %v181
    %772 = vmatprep.subr.mxu0 0.0
    %773 = vmatpush2.msra.mxu0 %v176
    %774 = vmatprep.subr.mxu0 0.0
    %775 = vmatpush2.msra.mxu0 %v171
    %776 = vmatprep.subr.mxu0 0.0
    %777 = vmatpush2.msra.mxu0 %v166
    %778 = vmatprep.subr.mxu0 0.0
    %779 = vmatpush2.msra.mxu0 %v161
    %780 = vmatprep.subr.mxu0 0.0
    %781 = vmatpush2.msra.mxu0 %v156
    %782 = vmatprep.mubr.f32.mxu0 %v69
    %783 = vmatmul.mubr.f32.gmra.mxu0 %v68
    %v784 = vpop.f32.mrf.mxu0
    %v785 = vadd.f32 %v408, %v784
    %v786 = vpop.f32.mrf.mxu0
    %787 = vdwg.mxu0
    %788 = vmatprep.subr.mxu0 0.0
    %789 = vmatpush1.msra.mxu0 %v311
    %790 = vmatprep.subr.mxu0 0.0
    %791 = vmatpush1.msra.mxu0 %v306
    %792 = vmatprep.subr.mxu0 0.0
    %793 = vmatpush1.msra.mxu0 %v301
    %794 = vmatprep.subr.mxu0 0.0
    %795 = vmatpush1.msra.mxu0 %v296
    %796 = vmatprep.subr.mxu0 0.0
    %797 = vmatpush1.msra.mxu0 %v291
    %798 = vmatprep.subr.mxu0 0.0
    %799 = vmatpush1.msra.mxu0 %v286
    %800 = vmatprep.subr.mxu0 0.0
    %801 = vmatpush1.msra.mxu0 %v281
    %802 = vmatprep.subr.mxu0 0.0
    %803 = vmatpush1.msra.mxu0 %v276
    %804 = vmatprep.subr.mxu0 0.0
    %805 = vmatpush1.msra.mxu0 %v271
    %806 = vmatprep.subr.mxu0 0.0
    %807 = vmatpush1.msra.mxu0 %v266
    %808 = vmatprep.subr.mxu0 0.0
    %809 = vmatpush1.msra.mxu0 %v261
    %810 = vmatprep.subr.mxu0 0.0
    %811 = vmatpush1.msra.mxu0 %v256
    %812 = vmatprep.subr.mxu0 0.0
    %813 = vmatpush1.msra.mxu0 %v251
    %814 = vmatprep.subr.mxu0 0.0
    %815 = vmatpush1.msra.mxu0 %v246
    %816 = vmatprep.subr.mxu0 0.0
    %817 = vmatpush1.msra.mxu0 %v241
    %818 = vmatprep.subr.mxu0 0.0
    %819 = vmatpush1.msra.mxu0 %v236
    %820 = vmatprep.subr.mxu0 0.0
    %821 = vmatpush2.msra.mxu0 0.0
    %822 = vmatprep.subr.mxu0 0.0
    %823 = vmatpush2.msra.mxu0 %v432
    %824 = vmatprep.subr.mxu0 0.0
    %825 = vmatpush2.msra.mxu0 %v381
    %826 = vmatprep.subr.mxu0 0.0
    %827 = vmatpush2.msra.mxu0 %v376
    %828 = vmatprep.subr.mxu0 0.0
    %829 = vmatpush2.msra.mxu0 %v371
    %830 = vmatprep.subr.mxu0 0.0
    %831 = vmatpush2.msra.mxu0 %v366
    %832 = vmatprep.subr.mxu0 0.0
    %833 = vmatpush2.msra.mxu0 %v361
    %834 = vmatprep.subr.mxu0 0.0
    %835 = vmatpush2.msra.mxu0 %v356
    %836 = vmatprep.subr.mxu0 0.0
    %837 = vmatpush2.msra.mxu0 %v351
    %838 = vmatprep.subr.mxu0 0.0
    %839 = vmatpush2.msra.mxu0 %v346
    %840 = vmatprep.subr.mxu0 0.0
    %841 = vmatpush2.msra.mxu0 %v341
    %842 = vmatprep.subr.mxu0 0.0
    %843 = vmatpush2.msra.mxu0 %v336
    %844 = vmatprep.subr.mxu0 0.0
    %845 = vmatpush2.msra.mxu0 %v331
    %846 = vmatprep.subr.mxu0 0.0
    %847 = vmatpush2.msra.mxu0 %v326
    %848 = vmatprep.subr.mxu0 0.0
    %849 = vmatpush2.msra.mxu0 %v321
    %850 = vmatprep.subr.mxu0 0.0
    %851 = vmatpush2.msra.mxu0 %v316
    %852 = vmatprep.mubr.f32.mxu0 %v416
    %853 = vmatmul.mubr.f32.gmra.mxu0 %v70
    %v854 = vpop.f32.mrf.mxu0
    %v855 = vadd.f32 %v785, %v854
    %v856 = vpop.f32.mrf.mxu0
    %857 = vdwg.mxu0
    %v858 = vmax.f32 %v572, 0.0
    %v859 = vmax.f32 %v574, 0.0
    %v860 = vmax.f32 %v714, 0.0
    %v861 = vmax.f32 %v716, 0.0
    %v862 = vmax.f32 %v855, 0.0
    %v863 = vld [vmem:[#allocation7] sm:$0xff]
    %v864 = vld [vmem:[#allocation7 + $0x8] sm:$0xff]
    %v865 = vld [vmem:[#allocation7 + $0x10] sm:$0xff]
    %v866 = vld [vmem:[#allocation7 + $0x18] sm:$0xff]
    %v867 = vld [vmem:[#allocation7 + $0x20] sm:$0xff]
    %v868 = vld [vmem:[#allocation7 + $0x28] sm:$0xff]
    %v869 = vld [vmem:[#allocation7 + $0x30] sm:$0xff]
    %v870 = vld [vmem:[#allocation7 + $0x38] sm:$0xff]
    %v871 = vld [vmem:[#allocation7 + $0x40] sm:$0xff]
    %v872 = vld [vmem:[#allocation7 + $0x48] sm:$0xff]
    %v873 = vld [vmem:[#allocation7 + $0x50] sm:$0xff]
    %v874 = vld [vmem:[#allocation7 + $0x58] sm:$0xff]
    %v875 = vld [vmem:[#allocation7 + $0x60] sm:$0xff]
    %v876 = vld [vmem:[#allocation7 + $0x68] sm:$0xff]
    %v877 = vld [vmem:[#allocation7 + $0x70] sm:$0xff]
    %v878 = vld [vmem:[#allocation7 + $0x78] sm:$0xff]
    %v879 = vld [vmem:[#allocation7 + $0x80] sm:$0xff]
    %v880 = vld [vmem:[#allocation7 + $0x88] sm:$0xff]
    %v881 = vld [vmem:[#allocation7 + $0x90] sm:$0xff]
    %v882 = vld [vmem:[#allocation7 + $0x98] sm:$0xff]
    %v883 = vld [vmem:[#allocation7 + $0xa0] sm:$0xff]
    %v884 = vld [vmem:[#allocation7 + $0xa8] sm:$0xff]
    %v885 = vld [vmem:[#allocation7 + $0xb0] sm:$0xff]
    %v886 = vld [vmem:[#allocation7 + $0xb8] sm:$0xff]
    %v887 = vld [vmem:[#allocation7 + $0xc0] sm:$0xff]
    %v888 = vld [vmem:[#allocation7 + $0xc8] sm:$0xff]
    %v889 = vld [vmem:[#allocation7 + $0xd0] sm:$0xff]
    %v890 = vld [vmem:[#allocation7 + $0xd8] sm:$0xff]
    %v891 = vld [vmem:[#allocation7 + $0xe0] sm:$0xff]
    %v892 = vld [vmem:[#allocation7 + $0xe8] sm:$0xff]
    %v893 = vld [vmem:[#allocation7 + $0xf0] sm:$0xff]
    %v894 = vld [vmem:[#allocation7 + $0xf8] sm:$0xff]
    %v895 = vld [vmem:[#allocation7 + $0x100] sm:$0xff]
    %v896 = vld [vmem:[#allocation7 + $0x108] sm:$0xff]
    %v897 = vld [vmem:[#allocation7 + $0x110] sm:$0xff]
    %v898 = vld [vmem:[#allocation7 + $0x118] sm:$0xff]
    %v899 = vld [vmem:[#allocation7 + $0x120] sm:$0xff]
    %v900 = vld [vmem:[#allocation7 + $0x128] sm:$0xff]
    %v901 = vld [vmem:[#allocation7 + $0x130] sm:$0xff]
    %v902 = vld [vmem:[#allocation7 + $0x138] sm:$0xff]
    %v903 = vld [vmem:[#allocation7 + $0x140] sm:$0xff]
    %v904 = vld [vmem:[#allocation7 + $0x148] sm:$0xff]
    %v905 = vld [vmem:[#allocation7 + $0x150] sm:$0xff]
    %v906 = vld [vmem:[#allocation7 + $0x158] sm:$0xff]
    %v907 = vld [vmem:[#allocation7 + $0x160] sm:$0xff]
    %v908 = vld [vmem:[#allocation7 + $0x168] sm:$0xff]
    %v909 = vld [vmem:[#allocation7 + $0x170] sm:$0xff]
    %v910 = vld [vmem:[#allocation7 + $0x178] sm:$0xff]
    %v911 = vld [vmem:[#allocation7 + $0x180] sm:$0xff]
    %v912 = vld [vmem:[#allocation7 + $0x188] sm:$0xff]
    %v913 = vld [vmem:[#allocation7 + $0x190] sm:$0xff]
    %v914 = vld [vmem:[#allocation7 + $0x198] sm:$0xff]
    %v915 = vld [vmem:[#allocation7 + $0x1a0] sm:$0xff]
    %v916 = vld [vmem:[#allocation7 + $0x1a8] sm:$0xff]
    %v917 = vld [vmem:[#allocation7 + $0x1b0] sm:$0xff]
    %v918 = vld [vmem:[#allocation7 + $0x1b8] sm:$0xff]
    %v919 = vld [vmem:[#allocation7 + $0x1c0] sm:$0xff]
    %v920 = vld [vmem:[#allocation7 + $0x1c8] sm:$0xff]
    %v921 = vld [vmem:[#allocation7 + $0x1d0] sm:$0xff]
    %v922 = vld [vmem:[#allocation7 + $0x1d8] sm:$0xff]
    %v923 = vld [vmem:[#allocation7 + $0x1e0] sm:$0xff]
    %v924 = vld [vmem:[#allocation7 + $0x1e8] sm:$0xff]
    %v925 = vld [vmem:[#allocation7 + $0x1f0] sm:$0xff]
    %v926 = vld [vmem:[#allocation7 + $0x1f8] sm:$0xff]
    %v927 = vld [vmem:[#allocation7 + $0x200] sm:$0xff]
    %v928 = vld [vmem:[#allocation7 + $0x208] sm:$0xff]
    %v929 = vld [vmem:[#allocation7 + $0x210] sm:$0xff]
    %v930 = vld [vmem:[#allocation7 + $0x218] sm:$0xff]
    %v931 = vld [vmem:[#allocation7 + $0x220] sm:$0xff]
    %v932 = vld [vmem:[#allocation7 + $0x228] sm:$0xff]
    %v933 = vld [vmem:[#allocation7 + $0x230] sm:$0xff]
    %v934 = vld [vmem:[#allocation7 + $0x238] sm:$0xff]
    %v935 = vld [vmem:[#allocation7 + $0x240] sm:$0xff]
    %v936 = vld [vmem:[#allocation7 + $0x248] sm:$0xff]
    %v937 = vld [vmem:[#allocation7 + $0x250] sm:$0xff]
    %v938 = vld [vmem:[#allocation7 + $0x258] sm:$0xff]
    %v939 = vld [vmem:[#allocation7 + $0x260] sm:$0xff]
    %v940 = vld [vmem:[#allocation7 + $0x268] sm:$0xff]
    %v941 = vld [vmem:[#allocation7 + $0x270] sm:$0xff]
    %v942 = vld [vmem:[#allocation7 + $0x278] sm:$0xff]
    %943 = vmatprep.subr.mxu0 0.0
    %944 = vmatpush1.msra.mxu0 %v878
    %945 = vmatprep.subr.mxu0 0.0
    %946 = vmatpush1.msra.mxu0 %v877
    %947 = vmatprep.subr.mxu0 0.0
    %948 = vmatpush1.msra.mxu0 %v876
    %949 = vmatprep.subr.mxu0 0.0
    %950 = vmatpush1.msra.mxu0 %v875
    %951 = vmatprep.subr.mxu0 0.0
    %952 = vmatpush1.msra.mxu0 %v874
    %953 = vmatprep.subr.mxu0 0.0
    %954 = vmatpush1.msra.mxu0 %v873
    %955 = vmatprep.subr.mxu0 0.0
    %956 = vmatpush1.msra.mxu0 %v872
    %957 = vmatprep.subr.mxu0 0.0
    %958 = vmatpush1.msra.mxu0 %v871
    %959 = vmatprep.subr.mxu0 0.0
    %960 = vmatpush1.msra.mxu0 %v870
    %961 = vmatprep.subr.mxu0 0.0
    %962 = vmatpush1.msra.mxu0 %v869
    %963 = vmatprep.subr.mxu0 0.0
    %964 = vmatpush1.msra.mxu0 %v868
    %965 = vmatprep.subr.mxu0 0.0
    %966 = vmatpush1.msra.mxu0 %v867
    %967 = vmatprep.subr.mxu0 0.0
    %968 = vmatpush1.msra.mxu0 %v866
    %969 = vmatprep.subr.mxu0 0.0
    %970 = vmatpush1.msra.mxu0 %v865
    %971 = vmatprep.subr.mxu0 0.0
    %972 = vmatpush1.msra.mxu0 %v864
    %973 = vmatprep.subr.mxu0 0.0
    %974 = vmatpush1.msra.mxu0 %v863
    %975 = vmatprep.subr.mxu0 0.0
    %976 = vmatpush2.msra.mxu0 %v894
    %977 = vmatprep.subr.mxu0 0.0
    %978 = vmatpush2.msra.mxu0 %v893
    %979 = vmatprep.subr.mxu0 0.0
    %980 = vmatpush2.msra.mxu0 %v892
    %981 = vmatprep.subr.mxu0 0.0
    %982 = vmatpush2.msra.mxu0 %v891
    %983 = vmatprep.subr.mxu0 0.0
    %984 = vmatpush2.msra.mxu0 %v890
    %985 = vmatprep.subr.mxu0 0.0
    %986 = vmatpush2.msra.mxu0 %v889
    %987 = vmatprep.subr.mxu0 0.0
    %988 = vmatpush2.msra.mxu0 %v888
    %989 = vmatprep.subr.mxu0 0.0
    %990 = vmatpush2.msra.mxu0 %v887
    %991 = vmatprep.subr.mxu0 0.0
    %992 = vmatpush2.msra.mxu0 %v886
    %993 = vmatprep.subr.mxu0 0.0
    %994 = vmatpush2.msra.mxu0 %v885
    %995 = vmatprep.subr.mxu0 0.0
    %996 = vmatpush2.msra.mxu0 %v884
    %997 = vmatprep.subr.mxu0 0.0
    %998 = vmatpush2.msra.mxu0 %v883
    %999 = vmatprep.subr.mxu0 0.0
    %1000 = vmatpush2.msra.mxu0 %v882
    %1001 = vmatprep.subr.mxu0 0.0
    %1002 = vmatpush2.msra.mxu0 %v881
    %1003 = vmatprep.subr.mxu0 0.0
    %1004 = vmatpush2.msra.mxu0 %v880
    %1005 = vmatprep.subr.mxu0 0.0
    %1006 = vmatpush2.msra.mxu0 %v879
    %1007 = vmatprep.mubr.f32.mxu0 %v859
    %1008 = vmatmul.mubr.f32.gmra.mxu0 %v858
    %v1009 = vpop.f32.mrf.mxu0
    %v1010 = vadd.f32 0.0, %v1009
    %v1011 = vpop.f32.mrf.mxu0
    %1012 = vdwg.mxu0
    %1013 = vmatprep.subr.mxu0 0.0
    %1014 = vmatpush1.msra.mxu0 %v910
    %1015 = vmatprep.subr.mxu0 0.0
    %1016 = vmatpush1.msra.mxu0 %v909
    %1017 = vmatprep.subr.mxu0 0.0
    %1018 = vmatpush1.msra.mxu0 %v908
    %1019 = vmatprep.subr.mxu0 0.0
    %1020 = vmatpush1.msra.mxu0 %v907
    %1021 = vmatprep.subr.mxu0 0.0
    %1022 = vmatpush1.msra.mxu0 %v906
    %1023 = vmatprep.subr.mxu0 0.0
    %1024 = vmatpush1.msra.mxu0 %v905
    %1025 = vmatprep.subr.mxu0 0.0
    %1026 = vmatpush1.msra.mxu0 %v904
    %1027 = vmatprep.subr.mxu0 0.0
    %1028 = vmatpush1.msra.mxu0 %v903
    %1029 = vmatprep.subr.mxu0 0.0
    %1030 = vmatpush1.msra.mxu0 %v902
    %1031 = vmatprep.subr.mxu0 0.0
    %1032 = vmatpush1.msra.mxu0 %v901
    %1033 = vmatprep.subr.mxu0 0.0
    %1034 = vmatpush1.msra.mxu0 %v900
    %1035 = vmatprep.subr.mxu0 0.0
    %1036 = vmatpush1.msra.mxu0 %v899
    %1037 = vmatprep.subr.mxu0 0.0
    %1038 = vmatpush1.msra.mxu0 %v898
    %1039 = vmatprep.subr.mxu0 0.0
    %1040 = vmatpush1.msra.mxu0 %v897
    %1041 = vmatprep.subr.mxu0 0.0
    %1042 = vmatpush1.msra.mxu0 %v896
    %1043 = vmatprep.subr.mxu0 0.0
    %1044 = vmatpush1.msra.mxu0 %v895
    %1045 = vmatprep.subr.mxu0 0.0
    %1046 = vmatpush2.msra.mxu0 %v926
    %1047 = vmatprep.subr.mxu0 0.0
    %1048 = vmatpush2.msra.mxu0 %v925
    %1049 = vmatprep.subr.mxu0 0.0
    %1050 = vmatpush2.msra.mxu0 %v924
    %1051 = vmatprep.subr.mxu0 0.0
    %1052 = vmatpush2.msra.mxu0 %v923
    %1053 = vmatprep.subr.mxu0 0.0
    %1054 = vmatpush2.msra.mxu0 %v922
    %1055 = vmatprep.subr.mxu0 0.0
    %1056 = vmatpush2.msra.mxu0 %v921
    %1057 = vmatprep.subr.mxu0 0.0
    %1058 = vmatpush2.msra.mxu0 %v920
    %1059 = vmatprep.subr.mxu0 0.0
    %1060 = vmatpush2.msra.mxu0 %v919
    %1061 = vmatprep.subr.mxu0 0.0
    %1062 = vmatpush2.msra.mxu0 %v918
    %1063 = vmatprep.subr.mxu0 0.0
    %1064 = vmatpush2.msra.mxu0 %v917
    %1065 = vmatprep.subr.mxu0 0.0
    %1066 = vmatpush2.msra.mxu0 %v916
    %1067 = vmatprep.subr.mxu0 0.0
    %1068 = vmatpush2.msra.mxu0 %v915
    %1069 = vmatprep.subr.mxu0 0.0
    %1070 = vmatpush2.msra.mxu0 %v914
    %1071 = vmatprep.subr.mxu0 0.0
    %1072 = vmatpush2.msra.mxu0 %v913
    %1073 = vmatprep.subr.mxu0 0.0
    %1074 = vmatpush2.msra.mxu0 %v912
    %1075 = vmatprep.subr.mxu0 0.0
    %1076 = vmatpush2.msra.mxu0 %v911
    %1077 = vmatprep.mubr.f32.mxu0 %v861
    %1078 = vmatmul.mubr.f32.gmra.mxu0 %v860
    %v1079 = vpop.f32.mrf.mxu0
    %v1080 = vadd.f32 %v1010, %v1079
    %v1081 = vpop.f32.mrf.mxu0
    %1082 = vdwg.mxu0
    %1083 = vmatprep.subr.mxu0 0.0
    %1084 = vmatpush1.msra.mxu0 %v942
    %1085 = vmatprep.subr.mxu0 0.0
    %1086 = vmatpush1.msra.mxu0 %v941
    %1087 = vmatprep.subr.mxu0 0.0
    %1088 = vmatpush1.msra.mxu0 %v940
    %1089 = vmatprep.subr.mxu0 0.0
    %1090 = vmatpush1.msra.mxu0 %v939
    %1091 = vmatprep.subr.mxu0 0.0
    %1092 = vmatpush1.msra.mxu0 %v938
    %1093 = vmatprep.subr.mxu0 0.0
    %1094 = vmatpush1.msra.mxu0 %v937
    %1095 = vmatprep.subr.mxu0 0.0
    %1096 = vmatpush1.msra.mxu0 %v936
    %1097 = vmatprep.subr.mxu0 0.0
    %1098 = vmatpush1.msra.mxu0 %v935
    %1099 = vmatprep.subr.mxu0 0.0
    %1100 = vmatpush1.msra.mxu0 %v934
    %1101 = vmatprep.subr.mxu0 0.0
    %1102 = vmatpush1.msra.mxu0 %v933
    %1103 = vmatprep.subr.mxu0 0.0
    %1104 = vmatpush1.msra.mxu0 %v932
    %1105 = vmatprep.subr.mxu0 0.0
    %1106 = vmatpush1.msra.mxu0 %v931
    %1107 = vmatprep.subr.mxu0 0.0
    %1108 = vmatpush1.msra.mxu0 %v930
    %1109 = vmatprep.subr.mxu0 0.0
    %1110 = vmatpush1.msra.mxu0 %v929
    %1111 = vmatprep.subr.mxu0 0.0
    %1112 = vmatpush1.msra.mxu0 %v928
    %1113 = vmatprep.subr.mxu0 0.0
    %1114 = vmatpush1.msra.mxu0 %v927
    %1115 = vmatprep.subr.mxu0 0.0
    %1116 = vmatpush2.msra.mxu0 0.0
    %1117 = vmatprep.subr.mxu0 0.0
    %1118 = vmatpush2.msra.mxu0 0.0
    %1119 = vmatprep.subr.mxu0 0.0
    %1120 = vmatpush2.msra.mxu0 0.0
    %1121 = vmatprep.subr.mxu0 0.0
    %1122 = vmatpush2.msra.mxu0 0.0
    %1123 = vmatprep.subr.mxu0 0.0
    %1124 = vmatpush2.msra.mxu0 0.0
    %1125 = vmatprep.subr.mxu0 0.0
    %1126 = vmatpush2.msra.mxu0 0.0
    %1127 = vmatprep.subr.mxu0 0.0
    %1128 = vmatpush2.msra.mxu0 0.0
    %1129 = vmatprep.subr.mxu0 0.0
    %1130 = vmatpush2.msra.mxu0 0.0
    %1131 = vmatprep.subr.mxu0 0.0
    %1132 = vmatpush2.msra.mxu0 0.0
    %1133 = vmatprep.subr.mxu0 0.0
    %1134 = vmatpush2.msra.mxu0 0.0
    %1135 = vmatprep.subr.mxu0 0.0
    %1136 = vmatpush2.msra.mxu0 0.0
    %1137 = vmatprep.subr.mxu0 0.0
    %1138 = vmatpush2.msra.mxu0 0.0
    %1139 = vmatprep.subr.mxu0 0.0
    %1140 = vmatpush2.msra.mxu0 0.0
    %1141 = vmatprep.subr.mxu0 0.0
    %1142 = vmatpush2.msra.mxu0 0.0
    %1143 = vmatprep.subr.mxu0 0.0
    %1144 = vmatpush2.msra.mxu0 0.0
    %1145 = vmatprep.subr.mxu0 0.0
    %1146 = vmatpush2.msra.mxu0 0.0
    %1147 = vmatprep.mubr.f32.mxu0 0.0
    %1148 = vmatmul.mubr.f32.gmra.mxu0 %v862
    %v1149 = vpop.f32.mrf.mxu0
    %v1150 = vadd.f32 %v1080, %v1149
    %v1151 = vpop.f32.mrf.mxu0
    %1152 = vdwg.mxu0
    %1153 = vst [vmem:[%s4] sm:$0xff] %v1150
    // Predicated region
    $region34: #{simple_mlp_icentia.1} parent=1 // pred_check
      _
    $region35: #{simple_mlp_icentia.1} parent=1 // pred_check_branch
      %1155 = sbr.rel (0) target = $region37
    $region36: #{simple_mlp_icentia.1} parent=1 // pred_region
      _
    $region37: #{simple_mlp_icentia.1} parent=1 // pred_fallthru
      _
    // Predicated region
    $region38: #{simple_mlp_icentia.1} parent=1 // pred_check
      _
    $region39: #{simple_mlp_icentia.1} parent=1 // pred_check_branch
      %1157 = sbr.rel (0) target = $region41
    $region40: #{simple_mlp_icentia.1} parent=1 // pred_region
      _
    $region41: #{simple_mlp_icentia.1} parent=1 // pred_fallthru
      _
    %1158 = vsyncpa [#allocation3], 1
    %1159 = vsyncpa [#allocation5], 1
    %1160 = vsyncpa [#allocation8], 1

</llo_original>
